<compile_context>
chip_gen: v5e
topology: v5e:2x2
jax: 0.10.0
libtpu: 0.0.40
codegen_flags: <defaults>
</compile_context>

<pallas_src>
import jax
import jax.numpy as jnp
from jax.experimental import pallas as pl
from jax.experimental.pallas import tpu as pltpu

LANE = 128        # TPU lane width: last dims padded to a multiple of this
BATCH_TILE = 128  # rows per grid step (fills one MXU pass on v5e, fine on v6e/v7x)


def _round_up(n, m):
    return ((n + m - 1) // m) * m


def actor_kernel(x_ref, w1_ref, b1_ref, w2_ref, b2_ref, wmu_ref, bmu_ref,
                 scale_ref, bias_ref, out_ref):
    """One batch tile of the fused actor MLP.

    x_ref   : (TB, obs_p)  f32   (obs zero-padded to a lane multiple)
    w*_ref  : bf16 (in, out) weights, lane-padded; biases/scale/bias f32 (1, out)
    out_ref : (TB, act_p)  f32   (act zero-padded to a lane multiple)

    Matmuls run bf16 x bf16 -> f32 on the MXU; all elementwise math stays f32
    on the VPU/EUP (required on v5e, free on v6e/v7x).
    """
    x = x_ref[...].astype(jnp.bfloat16)

    # fc1 + relu
    h1 = jnp.dot(x, w1_ref[...], preferred_element_type=jnp.float32)
    h1 = jnp.maximum(h1 + b1_ref[...], 0.0)

    # fc2 + relu
    h2 = jnp.dot(h1.astype(jnp.bfloat16), w2_ref[...],
                 preferred_element_type=jnp.float32)
    h2 = jnp.maximum(h2 + b2_ref[...], 0.0)

    # fc_mu + tanh
    mu = jnp.dot(h2.astype(jnp.bfloat16), wmu_ref[...],
                 preferred_element_type=jnp.float32)
    mu = jnp.tanh(mu + bmu_ref[...])

    # rescale to the action range (padded columns are all-zero -> output 0)
    out_ref[...] = mu * scale_ref[...] + bias_ref[...]


def actor_forward(x, kparams, *, batch_tile=BATCH_TILE):
    """x: (B, obs_dim) float32 -> (B, act_dim) float32."""
    w1, b1, w2, b2, wmu, bmu, scale, bias = kparams["tensors"]
    obs_dim = kparams["obs_dim"]
    act_dim = kparams["act_dim"]
    obs_p = w1.shape[0]
    act_p = wmu.shape[1]

    B = x.shape[0]
    b_pad = _round_up(max(B, batch_tile), batch_tile)
    # zero-pad batch rows and obs columns so every tile is sublane/lane-dense
    x_p = jnp.zeros((b_pad, obs_p), jnp.float32).at[:B, :obs_dim].set(x)

    n_tiles = b_pad // batch_tile
    vmem = pltpu.MemorySpace.VMEM

    # whole-array, grid-invariant spec: DMA'd into VMEM once, kept resident
    def resident(a):
        return pl.BlockSpec(a.shape, lambda i: (0,) * a.ndim, memory_space=vmem)

    out = pl.pallas_call(
        actor_kernel,
        out_shape=jax.ShapeDtypeStruct((b_pad, act_p), jnp.float32),
        grid=(n_tiles,),
        in_specs=[
            pl.BlockSpec((batch_tile, obs_p), lambda i: (i, 0),
                         memory_space=vmem),
            resident(w1), resident(b1), resident(w2), resident(b2),
            resident(wmu), resident(bmu), resident(scale), resident(bias),
        ],
        out_specs=pl.BlockSpec((batch_tile, act_p), lambda i: (i, 0),
                               memory_space=vmem),
        compiler_params=pltpu.CompilerParams(
            dimension_semantics=("parallel",),  # shard batch tiles over v7x's 2 TCs
            vmem_limit_bytes=8 << 20,           # resident footprint < 1 MiB
        ),
    )(x_p, w1, b1, w2, b2, wmu, bmu, scale, bias)

    return out[:B, :act_dim]


def init_params(key, obs_dim, act_dim, action_low, action_high, hidden=256):
    """Deterministic synthetic f32 params (PyTorch nn.Linear-like uniform init).

    Weights stored as (in, out) — transpose of torch's (out, in).
    """
    ks = jax.random.split(key, 6)

    def linear(kw, kb, fan_in, fan_out):
        bound = 1.0 / jnp.sqrt(fan_in)
        w = jax.random.uniform(kw, (fan_in, fan_out), jnp.float32, -bound, bound)
        b = jax.random.uniform(kb, (1, fan_out), jnp.float32, -bound, bound)
        return w, b

    w1, b1 = linear(ks[0], ks[1], obs_dim, hidden)
    w2, b2 = linear(ks[2], ks[3], hidden, hidden)
    wmu, bmu = linear(ks[4], ks[5], hidden, act_dim)

    action_low = jnp.asarray(action_low, jnp.float32).reshape(1, act_dim)
    action_high = jnp.asarray(action_high, jnp.float32).reshape(1, act_dim)
    scale = (action_high - action_low) / 2.0
    bias = (action_high + action_low) / 2.0
    return (w1, b1, w2, b2, wmu, bmu, scale, bias)


def pack_params(params, obs_dim, act_dim):
    """Static (one-time) lane-dense padding + bf16 cast for the kernel."""
    w1, b1, w2, b2, wmu, bmu, scale, bias = params
    hidden = w1.shape[1]
    obs_p = _round_up(obs_dim, LANE)
    act_p = _round_up(act_dim, LANE)

    w1_p = jnp.zeros((obs_p, hidden), jnp.float32).at[:obs_dim, :].set(w1)
    wmu_p = jnp.zeros((hidden, act_p), jnp.float32).at[:, :act_dim].set(wmu)
    pad_row = lambda v: jnp.zeros((1, act_p), jnp.float32).at[:, :act_dim].set(v)

    tensors = (
        w1_p.astype(jnp.bfloat16), b1,
        w2.astype(jnp.bfloat16), b2,
        wmu_p.astype(jnp.bfloat16), pad_row(bmu),
        pad_row(scale), pad_row(bias),
    )
    return {"tensors": tensors, "obs_dim": obs_dim, "act_dim": act_dim}


def actor_forward_ref(x, params):
    """Plain-JAX f32 reference (exact PyTorch module semantics)."""
    w1, b1, w2, b2, wmu, bmu, scale, bias = params
    h1 = jax.nn.relu(x @ w1 + b1)
    h2 = jax.nn.relu(h1 @ w2 + b2)
    mu = jnp.tanh(h2 @ wmu + bmu)
    return mu * scale + bias


def actor_forward_ref_bf16(x, params):
    """Reference mirroring the kernel numerics (bf16 matmul operands, f32 accum)."""
    w1, b1, w2, b2, wmu, bmu, scale, bias = params
    bf = jnp.bfloat16
    dot = lambda a, b: jnp.dot(a.astype(bf), b.astype(bf),
                               preferred_element_type=jnp.float32)
    h1 = jax.nn.relu(dot(x, w1) + b1)
    h2 = jax.nn.relu(dot(h1, w2) + b2)
    mu = jnp.tanh(dot(h2, wmu) + bmu)
    return mu * scale + bias


if __name__ == "__main__":
    OBS_DIM, HIDDEN, ACT_DIM = 32, 256, 8

    key = jax.random.PRNGKey(0)
    k_x1, k_x2, k_p = jax.random.split(key, 3)

    # synthetic action-space bounds, e.g. torque limits in [-1.5, 1.5]
    action_low = -1.5 * jnp.ones((ACT_DIM,), jnp.float32)
    action_high = 1.5 * jnp.ones((ACT_DIM,), jnp.float32)

    params = init_params(k_p, OBS_DIM, ACT_DIM, action_low, action_high,
                         hidden=HIDDEN)
    kparams = pack_params(params, OBS_DIM, ACT_DIM)

    # B=8: single grid step (padded batch tile). B=300: three tiles + ragged tail.
    for k_x, B in ((k_x1, 8), (k_x2, 300)):
        x = jax.random.normal(k_x, (B, OBS_DIM), jnp.float32)

        out = jax.block_until_ready(actor_forward(x, kparams))
        assert out.shape == (B, ACT_DIM)

        ref_bf16 = actor_forward_ref_bf16(x, params)  # same numerics as kernel
        ref_f32 = actor_forward_ref(x, params)        # module-exact f32
        assert jnp.allclose(out, ref_bf16, atol=2e-3, rtol=2e-3), \
            "mismatch vs bf16-matmul reference"
        assert jnp.allclose(out, ref_f32, atol=5e-2, rtol=5e-2), \
            "mismatch vs f32 reference"

    print("KERNEL_OK")
</pallas_src>

<mosaic_0001>
module attributes {stable_mosaic.version = 11 : i64} {
  func.func @actor_kernel(%arg0: i32, %arg1: memref<128x128xf32, #tpu.memory_space<vmem>>, %arg2: memref<128x256xbf16, #tpu.memory_space<vmem>>, %arg3: memref<1x256xf32, #tpu.memory_space<vmem>>, %arg4: memref<256x256xbf16, #tpu.memory_space<vmem>>, %arg5: memref<1x256xf32, #tpu.memory_space<vmem>>, %arg6: memref<256x128xbf16, #tpu.memory_space<vmem>>, %arg7: memref<1x128xf32, #tpu.memory_space<vmem>>, %arg8: memref<1x128xf32, #tpu.memory_space<vmem>>, %arg9: memref<1x128xf32, #tpu.memory_space<vmem>>, %arg10: memref<128x128xf32, #tpu.memory_space<vmem>>) attributes {dimension_semantics = [#tpu.dimension_semantics<parallel>], iteration_bounds = array<i64: 1>, scalar_prefetch = 0 : i64, scratch_operands = 0 : i64, tpu.core_type = #tpu.core_type<tc>, window_params = [{transform_indices = @transform_0, window_bounds = array<i64: 128, 128>}, {pipeline_mode = #tpu.pipeline_mode<synchronous>, transform_indices = @transform_1, window_bounds = array<i64: 128, 256>}, {pipeline_mode = #tpu.pipeline_mode<synchronous>, transform_indices = @transform_2, window_bounds = array<i64: 1, 256>}, {pipeline_mode = #tpu.pipeline_mode<synchronous>, transform_indices = @transform_3, window_bounds = array<i64: 256, 256>}, {pipeline_mode = #tpu.pipeline_mode<synchronous>, transform_indices = @transform_4, window_bounds = array<i64: 1, 256>}, {pipeline_mode = #tpu.pipeline_mode<synchronous>, transform_indices = @transform_5, window_bounds = array<i64: 256, 128>}, {pipeline_mode = #tpu.pipeline_mode<synchronous>, transform_indices = @transform_6, window_bounds = array<i64: 1, 128>}, {pipeline_mode = #tpu.pipeline_mode<synchronous>, transform_indices = @transform_7, window_bounds = array<i64: 1, 128>}, {pipeline_mode = #tpu.pipeline_mode<synchronous>, transform_indices = @transform_8, window_bounds = array<i64: 1, 128>}, {transform_indices = @transform_9, window_bounds = array<i64: 128, 128>}]} {
    %c0 = arith.constant 0 : index
    %c0_0 = arith.constant 0 : index
    %0 = vector.load %arg1[%c0, %c0_0] : memref<128x128xf32, #tpu.memory_space<vmem>>, vector<128x128xf32>
    %1 = arith.truncf %0 : vector<128x128xf32> to vector<128x128xbf16>
    %c0_1 = arith.constant 0 : index
    %c0_2 = arith.constant 0 : index
    %2 = vector.load %arg2[%c0_1, %c0_2] : memref<128x256xbf16, #tpu.memory_space<vmem>>, vector<128x256xbf16>
    %cst = arith.constant dense<0.000000e+00> : vector<128x256xf32>
    %3 = tpu.matmul %1, %2, %cst {dimension_numbers = #tpu.dot_dimension_numbers<[1], [0], [0], [1], [0, 0, 1, 1], [], []>} : vector<128x128xbf16>, vector<128x256xbf16>, vector<128x256xf32> -> vector<128x256xf32>
    %c0_3 = arith.constant 0 : index
    %c0_4 = arith.constant 0 : index
    %4 = vector.load %arg3[%c0_3, %c0_4] : memref<1x256xf32, #tpu.memory_space<vmem>>, vector<1x256xf32>
    %5 = vector.broadcast %4 : vector<1x256xf32> to vector<128x256xf32>
    %6 = arith.addf %3, %5 : vector<128x256xf32>
    %cst_5 = arith.constant 0.000000e+00 : f32
    %7 = vector.broadcast %cst_5 : f32 to vector<128x256xf32>
    %8 = arith.maximumf %6, %7 : vector<128x256xf32>
    %9 = arith.truncf %8 : vector<128x256xf32> to vector<128x256xbf16>
    %c0_6 = arith.constant 0 : index
    %c0_7 = arith.constant 0 : index
    %10 = vector.load %arg4[%c0_6, %c0_7] : memref<256x256xbf16, #tpu.memory_space<vmem>>, vector<256x256xbf16>
    %cst_8 = arith.constant dense<0.000000e+00> : vector<128x256xf32>
    %11 = tpu.matmul %9, %10, %cst_8 {dimension_numbers = #tpu.dot_dimension_numbers<[1], [0], [0], [1], [0, 0, 1, 1], [], []>} : vector<128x256xbf16>, vector<256x256xbf16>, vector<128x256xf32> -> vector<128x256xf32>
    %c0_9 = arith.constant 0 : index
    %c0_10 = arith.constant 0 : index
    %12 = vector.load %arg5[%c0_9, %c0_10] : memref<1x256xf32, #tpu.memory_space<vmem>>, vector<1x256xf32>
    %13 = vector.broadcast %12 : vector<1x256xf32> to vector<128x256xf32>
    %14 = arith.addf %11, %13 : vector<128x256xf32>
    %cst_11 = arith.constant 0.000000e+00 : f32
    %15 = vector.broadcast %cst_11 : f32 to vector<128x256xf32>
    %16 = arith.maximumf %14, %15 : vector<128x256xf32>
    %17 = arith.truncf %16 : vector<128x256xf32> to vector<128x256xbf16>
    %c0_12 = arith.constant 0 : index
    %c0_13 = arith.constant 0 : index
    %18 = vector.load %arg6[%c0_12, %c0_13] : memref<256x128xbf16, #tpu.memory_space<vmem>>, vector<256x128xbf16>
    %cst_14 = arith.constant dense<0.000000e+00> : vector<128x128xf32>
    %19 = tpu.matmul %17, %18, %cst_14 {dimension_numbers = #tpu.dot_dimension_numbers<[1], [0], [0], [1], [0, 0, 1, 1], [], []>} : vector<128x256xbf16>, vector<256x128xbf16>, vector<128x128xf32> -> vector<128x128xf32>
    %c0_15 = arith.constant 0 : index
    %c0_16 = arith.constant 0 : index
    %20 = vector.load %arg7[%c0_15, %c0_16] : memref<1x128xf32, #tpu.memory_space<vmem>>, vector<1x128xf32>
    %21 = vector.broadcast %20 : vector<1x128xf32> to vector<128x128xf32>
    %22 = arith.addf %19, %21 : vector<128x128xf32>
    %23 = math.tanh %22 : vector<128x128xf32>
    %c0_17 = arith.constant 0 : index
    %c0_18 = arith.constant 0 : index
    %24 = vector.load %arg8[%c0_17, %c0_18] : memref<1x128xf32, #tpu.memory_space<vmem>>, vector<1x128xf32>
    %25 = vector.broadcast %24 : vector<1x128xf32> to vector<128x128xf32>
    %26 = arith.mulf %23, %25 : vector<128x128xf32>
    %c0_19 = arith.constant 0 : index
    %c0_20 = arith.constant 0 : index
    %27 = vector.load %arg9[%c0_19, %c0_20] : memref<1x128xf32, #tpu.memory_space<vmem>>, vector<1x128xf32>
    %28 = vector.broadcast %27 : vector<1x128xf32> to vector<128x128xf32>
    %29 = arith.addf %26, %28 : vector<128x128xf32>
    %c0_21 = arith.constant 0 : index
    %c0_22 = arith.constant 0 : index
    %30 = vector.load %arg10[%c0_21, %c0_22] : memref<128x128xf32, #tpu.memory_space<vmem>>, vector<128x128xf32>
    tpu.vector_store %arg10[%c0_21, %c0_22], %29 {strides = array<i32>} : memref<128x128xf32, #tpu.memory_space<vmem>>, vector<128x128xf32>,
    return
  }
  func.func @transform_0(%arg0: i32) -> (i32, i32) {
    %c0_i32 = arith.constant 0 : i32
    %c0_i32_0 = arith.constant 0 : i32
    return %arg0, %c0_i32 : i32, i32
  }
  func.func @transform_1(%arg0: i32) -> (i32, i32) {
    %c0_i32 = arith.constant 0 : i32
    %c0_i32_0 = arith.constant 0 : i32
    %c0_i32_1 = arith.constant 0 : i32
    return %c0_i32, %c0_i32_0 : i32, i32
  }
  func.func @transform_2(%arg0: i32) -> (i32, i32) {
    %c0_i32 = arith.constant 0 : i32
    %c0_i32_0 = arith.constant 0 : i32
    %c0_i32_1 = arith.constant 0 : i32
    return %c0_i32, %c0_i32_0 : i32, i32
  }
  func.func @transform_3(%arg0: i32) -> (i32, i32) {
    %c0_i32 = arith.constant 0 : i32
    %c0_i32_0 = arith.constant 0 : i32
    %c0_i32_1 = arith.constant 0 : i32
    return %c0_i32, %c0_i32_0 : i32, i32
  }
  func.func @transform_4(%arg0: i32) -> (i32, i32) {
    %c0_i32 = arith.constant 0 : i32
    %c0_i32_0 = arith.constant 0 : i32
    %c0_i32_1 = arith.constant 0 : i32
    return %c0_i32, %c0_i32_0 : i32, i32
  }
  func.func @transform_5(%arg0: i32) -> (i32, i32) {
    %c0_i32 = arith.constant 0 : i32
    %c0_i32_0 = arith.constant 0 : i32
    %c0_i32_1 = arith.constant 0 : i32
    return %c0_i32, %c0_i32_0 : i32, i32
  }
  func.func @transform_6(%arg0: i32) -> (i32, i32) {
    %c0_i32 = arith.constant 0 : i32
    %c0_i32_0 = arith.constant 0 : i32
    %c0_i32_1 = arith.constant 0 : i32
    return %c0_i32, %c0_i32_0 : i32, i32
  }
  func.func @transform_7(%arg0: i32) -> (i32, i32) {
    %c0_i32 = arith.constant 0 : i32
    %c0_i32_0 = arith.constant 0 : i32
    %c0_i32_1 = arith.constant 0 : i32
    return %c0_i32, %c0_i32_0 : i32, i32
  }
  func.func @transform_8(%arg0: i32) -> (i32, i32) {
    %c0_i32 = arith.constant 0 : i32
    %c0_i32_0 = arith.constant 0 : i32
    %c0_i32_1 = arith.constant 0 : i32
    return %c0_i32, %c0_i32_0 : i32, i32
  }
  func.func @transform_9(%arg0: i32) -> (i32, i32) {
    %c0_i32 = arith.constant 0 : i32
    %c0_i32_0 = arith.constant 0 : i32
    return %arg0, %c0_i32 : i32, i32
  }
}

</mosaic_0001>

<llo_original>
// kernel: tpu_custom_call.1
$region0: #{tpu_custom_call.1}
  #allocation0 [shape = 'u32[]', space=smem, size = 0x4, offset = 0x4, fixed_abs, tag = 'smem constant byte address 0x4 - core index']
  #allocation1 [shape = 'u32[72,128]{1,0:T(1,128)}', space=vmem, size = 0x9000, scoped, tag = 'internal scratch']
  %s0 = inlined_call_operand.hbm [shape: f32[128,128], index: 0, kind: input, shape index: {}]
  %s1 = inlined_call_operand.hbm [shape: bf16[128,256], index: 1, kind: input, shape index: {}]
  %s2 = inlined_call_operand.hbm [shape: f32[1,256], index: 2, kind: input, shape index: {}]
  %s3 = inlined_call_operand.hbm [shape: bf16[256,256], index: 3, kind: input, shape index: {}]
  %s4 = inlined_call_operand.vmem [shape: f32[1,256], index: 4, kind: input, shape index: {}]
  %s5 = inlined_call_operand.hbm [shape: bf16[256,128], index: 5, kind: input, shape index: {}]
  %s6 = inlined_call_operand.vmem [shape: f32[1,128], index: 6, kind: input, shape index: {}]
  %s7 = inlined_call_operand.vmem [shape: f32[1,128], index: 7, kind: input, shape index: {}]
  %s8 = inlined_call_operand.vmem [shape: f32[1,128], index: 8, kind: input, shape index: {}]
  %s9 = inlined_call_operand.hbm [shape: f32[128,128], index: 9, kind: output, shape index: {}]
  %s10 = sld [smem:[#allocation0]]
  $region66: #{tpu_custom_call.1} parent=0
    _
  %s12 = ssub.s32 1, %s10
  %s13 = scalar_select 0, %s12, %s10
  $region1: #{tpu_custom_call.1} parent=0
    #allocation2 [shape = 'u8[65536]{0}', space=vmem, size = 0x10000, scoped, tag = 'input window, operand 0, single buffered']
    #allocation3 [shape = 's32[1]{0}', space=sflag, size = 0x4, scoped, tag = 'scoped memory for tpu_custom_call.1']
    #allocation4 [shape = 's32[1]{0}', space=sflag, size = 0x4, scoped, tag = 'scoped memory for tpu_custom_call.1']
    #allocation5 [shape = 'u8[65536]{0}', space=vmem, size = 0x10000, scoped, tag = 'input window, operand 1, single buffered']
    #allocation6 [shape = 's32[1]{0}', space=sflag, size = 0x4, scoped, tag = 'scoped memory for tpu_custom_call.1']
    #allocation7 [shape = 'u8[1024]{0}', space=vmem, size = 0x400, scoped, tag = 'input window, operand 2, single buffered']
    #allocation8 [shape = 'u8[131072]{0}', space=vmem, size = 0x20000, scoped, tag = 'input window, operand 3, single buffered']
    #allocation9 [shape = 's32[1]{0}', space=sflag, size = 0x4, scoped, tag = 'scoped memory for tpu_custom_call.1']
    #allocation10 [shape = 'u8[65536]{0}', space=vmem, size = 0x10000, scoped, tag = 'input window, operand 5, single buffered']
    #allocation11 [shape = 'u8[65536]{0}', space=vmem, size = 0x10000, scoped, tag = 'output window, operand 0, single buffered']
    %14 = vsyncpa [#allocation3], 0
    %15 = vsyncpa [#allocation6], 0
    %16 = vsyncpa [#allocation9], 0
    %17 = vsyncpa [#allocation4], 0
    // Predicated region
    $region2: #{tpu_custom_call.1} parent=1 // pred_check
      _
    $region3: #{tpu_custom_call.1} parent=1 // pred_check_branch
      %19 = sbr.rel (0) target = $region5
    $region4: #{tpu_custom_call.1} parent=1 // pred_region
      %21 = vsyncadd [#allocation3], 0
      %s22 = sshll.u32 %s0, 4
      %s23 = int_to_ptr.hbm [resolvable:$true] %s22
      %s24 = sshll.u32 [#allocation2], 4
      %s25 = int_to_ptr.vmem [resolvable:$true] %s24
      %30 = dma.hbm_to_vmem [thread:$0]  %s23, 2048, %s25, [#allocation3], 128, 128, 8
    $region5: #{tpu_custom_call.1} parent=1 // pred_fallthru
      _
    // Predicated region
    $region6: #{tpu_custom_call.1} parent=1 // pred_check
      _
    $region7: #{tpu_custom_call.1} parent=1 // pred_check_branch
      %32 = sbr.rel (0) target = $region9
    $region8: #{tpu_custom_call.1} parent=1 // pred_region
      %34 = vsyncadd [#allocation6], 0
      %s35 = sshll.u32 %s1, 4
      %s36 = int_to_ptr.hbm [resolvable:$true] %s35
      %s37 = sshll.u32 [#allocation5], 4
      %s38 = int_to_ptr.vmem [resolvable:$true] %s37
      %43 = dma.hbm_to_vmem [thread:$0]  %s36, 2048, %s38, [#allocation6], 128, 128, 8
    $region9: #{tpu_custom_call.1} parent=1 // pred_fallthru
      _
    // Predicated region
    $region10: #{tpu_custom_call.1} parent=1 // pred_check
      _
    $region11: #{tpu_custom_call.1} parent=1 // pred_check_branch
      %45 = sbr.rel (0) target = $region13
    $region12: #{tpu_custom_call.1} parent=1 // pred_region
      %47 = vsyncadd [#allocation6], 0
      %s49 = sshll.u32 %s2, 4
      %s50 = int_to_ptr.hbm [resolvable:$true] %s49
      %s51 = sshll.u32 [#allocation7], 4
      %s52 = int_to_ptr.vmem [resolvable:$true] %s51
      %54 = dma.hbm_to_vmem [thread:$0]  %s50, 32, %s52, [#allocation6]
    $region13: #{tpu_custom_call.1} parent=1 // pred_fallthru
      _
    // Predicated region
    $region14: #{tpu_custom_call.1} parent=1 // pred_check
      _
    $region15: #{tpu_custom_call.1} parent=1 // pred_check_branch
      %56 = sbr.rel (0) target = $region17
    $region16: #{tpu_custom_call.1} parent=1 // pred_region
      %58 = vsyncadd [#allocation9], 0
      %s59 = sshll.u32 %s3, 4
      %s60 = int_to_ptr.hbm [resolvable:$true] %s59
      %s61 = sshll.u32 [#allocation8], 4
      %s62 = int_to_ptr.vmem [resolvable:$true] %s61
      %67 = dma.hbm_to_vmem [thread:$0]  %s60, 4096, %s62, [#allocation9], 128, 128, 8
    $region17: #{tpu_custom_call.1} parent=1 // pred_fallthru
      _
    // Predicated region
    $region18: #{tpu_custom_call.1} parent=1 // pred_check
      _
    $region19: #{tpu_custom_call.1} parent=1 // pred_check_branch
      %69 = sbr.rel (0) target = $region21
    $region20: #{tpu_custom_call.1} parent=1 // pred_region
      _
    $region21: #{tpu_custom_call.1} parent=1 // pred_fallthru
      _
    // Predicated region
    $region22: #{tpu_custom_call.1} parent=1 // pred_check
      _
    $region23: #{tpu_custom_call.1} parent=1 // pred_check_branch
      %71 = sbr.rel (0) target = $region25
    $region24: #{tpu_custom_call.1} parent=1 // pred_region
      %73 = vsyncadd [#allocation9], 0
      %s74 = sshll.u32 %s5, 4
      %s75 = int_to_ptr.hbm [resolvable:$true] %s74
      %s76 = sshll.u32 [#allocation10], 4
      %s77 = int_to_ptr.vmem [resolvable:$true] %s76
      %82 = dma.hbm_to_vmem [thread:$0]  %s75, 2048, %s77, [#allocation9], 64, 64, 4
    $region25: #{tpu_custom_call.1} parent=1 // pred_fallthru
      _
    // Predicated region
    $region26: #{tpu_custom_call.1} parent=1 // pred_check
      _
    $region27: #{tpu_custom_call.1} parent=1 // pred_check_branch
      %84 = sbr.rel (0) target = $region29
    $region28: #{tpu_custom_call.1} parent=1 // pred_region
      _
    $region29: #{tpu_custom_call.1} parent=1 // pred_fallthru
      _
    // Predicated region
    $region30: #{tpu_custom_call.1} parent=1 // pred_check
      _
    $region31: #{tpu_custom_call.1} parent=1 // pred_check_branch
      %86 = sbr.rel (0) target = $region33
    $region32: #{tpu_custom_call.1} parent=1 // pred_region
      _
    $region33: #{tpu_custom_call.1} parent=1 // pred_fallthru
      _
    // Predicated region
    $region34: #{tpu_custom_call.1} parent=1 // pred_check
      _
    $region35: #{tpu_custom_call.1} parent=1 // pred_check_branch
      %88 = sbr.rel (0) target = $region37
    $region36: #{tpu_custom_call.1} parent=1 // pred_region
      _
    $region37: #{tpu_custom_call.1} parent=1 // pred_fallthru
      _
    // Predicated region
    $region38: #{tpu_custom_call.1} parent=1 // pred_check
      _
    $region39: #{tpu_custom_call.1} parent=1 // pred_check_branch
      %90 = sbr.rel (0) target = $region41
    $region40: #{tpu_custom_call.1} parent=1 // pred_region
      %92 = dma.done [#allocation3], 2048
    $region41: #{tpu_custom_call.1} parent=1 // pred_fallthru
      _
    // Predicated region
    $region42: #{tpu_custom_call.1} parent=1 // pred_check
      _
    $region43: #{tpu_custom_call.1} parent=1 // pred_check_branch
      %94 = sbr.rel (0) target = $region45
    $region44: #{tpu_custom_call.1} parent=1 // pred_region
      %96 = dma.done [#allocation6], 2048
    $region45: #{tpu_custom_call.1} parent=1 // pred_fallthru
      _
    // Predicated region
    $region46: #{tpu_custom_call.1} parent=1 // pred_check
      _
    $region47: #{tpu_custom_call.1} parent=1 // pred_check_branch
      %98 = sbr.rel (0) target = $region49
    $region48: #{tpu_custom_call.1} parent=1 // pred_region
      %100 = dma.done [#allocation6], 32
    $region49: #{tpu_custom_call.1} parent=1 // pred_fallthru
      _
    // Predicated region
    $region50: #{tpu_custom_call.1} parent=1 // pred_check
      _
    $region51: #{tpu_custom_call.1} parent=1 // pred_check_branch
      %102 = sbr.rel (0) target = $region53
    $region52: #{tpu_custom_call.1} parent=1 // pred_region
      %104 = dma.done [#allocation9], 4096
    $region53: #{tpu_custom_call.1} parent=1 // pred_fallthru
      _
    // Predicated region
    $region54: #{tpu_custom_call.1} parent=1 // pred_check
      _
    $region55: #{tpu_custom_call.1} parent=1 // pred_check_branch
      %106 = sbr.rel (0) target = $region57
    $region56: #{tpu_custom_call.1} parent=1 // pred_region
      %108 = dma.done [#allocation9], 2048
    $region57: #{tpu_custom_call.1} parent=1 // pred_fallthru
      _
    %v109 = vld [vmem:[#allocation2] sm:$0xff]
    %v110 = vld [vmem:[#allocation2 + $0x8] sm:$0xff]
    %v111 = vld [vmem:[#allocation2 + $0x10] sm:$0xff]
    %v112 = vld [vmem:[#allocation2 + $0x18] sm:$0xff]
    %v113 = vld [vmem:[#allocation2 + $0x20] sm:$0xff]
    %v114 = vld [vmem:[#allocation2 + $0x28] sm:$0xff]
    %v115 = vld [vmem:[#allocation2 + $0x30] sm:$0xff]
    %v116 = vld [vmem:[#allocation2 + $0x38] sm:$0xff]
    %v117 = vld [vmem:[#allocation2 + $0x40] sm:$0xff]
    %v118 = vld [vmem:[#allocation2 + $0x48] sm:$0xff]
    %v119 = vld [vmem:[#allocation2 + $0x50] sm:$0xff]
    %v120 = vld [vmem:[#allocation2 + $0x58] sm:$0xff]
    %v121 = vld [vmem:[#allocation2 + $0x60] sm:$0xff]
    %v122 = vld [vmem:[#allocation2 + $0x68] sm:$0xff]
    %v123 = vld [vmem:[#allocation2 + $0x70] sm:$0xff]
    %v124 = vld [vmem:[#allocation2 + $0x78] sm:$0xff]
    %v125 = vpack.c.bf16 %v110, %v109
    %v126 = vpack.c.bf16 %v112, %v111
    %v127 = vpack.c.bf16 %v114, %v113
    %v128 = vpack.c.bf16 %v116, %v115
    %v129 = vpack.c.bf16 %v118, %v117
    %v130 = vpack.c.bf16 %v120, %v119
    %v131 = vpack.c.bf16 %v122, %v121
    %v132 = vpack.c.bf16 %v124, %v123
    %v133 = vld [vmem:[#allocation5] sm:$0xff]
    %v134 = vld [vmem:[#allocation5 + $0x8] sm:$0xff]
    %v135 = vld [vmem:[#allocation5 + $0x10] sm:$0xff]
    %v136 = vld [vmem:[#allocation5 + $0x18] sm:$0xff]
    %v137 = vld [vmem:[#allocation5 + $0x20] sm:$0xff]
    %v138 = vld [vmem:[#allocation5 + $0x28] sm:$0xff]
    %v139 = vld [vmem:[#allocation5 + $0x30] sm:$0xff]
    %v140 = vld [vmem:[#allocation5 + $0x38] sm:$0xff]
    %v141 = vld [vmem:[#allocation5 + $0x40] sm:$0xff]
    %v142 = vld [vmem:[#allocation5 + $0x48] sm:$0xff]
    %v143 = vld [vmem:[#allocation5 + $0x50] sm:$0xff]
    %v144 = vld [vmem:[#allocation5 + $0x58] sm:$0xff]
    %v145 = vld [vmem:[#allocation5 + $0x60] sm:$0xff]
    %v146 = vld [vmem:[#allocation5 + $0x68] sm:$0xff]
    %v147 = vld [vmem:[#allocation5 + $0x70] sm:$0xff]
    %v148 = vld [vmem:[#allocation5 + $0x78] sm:$0xff]
    %v149 = vld [vmem:[#allocation7] sm:$0x3]
    %v151 = vperm.slane %v149, 0
    %v152 = vperm.slane %v149, 1
    %v171 = vunpack.c.l.b16 %v133
    %v172 = vunpack.c.h.b16 %v133
    %v173 = vunpack.c.l.b16 %v134
    %v174 = vunpack.c.h.b16 %v134
    %v175 = vunpack.c.l.b16 %v135
    %v176 = vunpack.c.h.b16 %v135
    %v177 = vunpack.c.l.b16 %v136
    %v178 = vunpack.c.h.b16 %v136
    %v179 = vunpack.c.l.b16 %v137
    %v180 = vunpack.c.h.b16 %v137
    %v181 = vunpack.c.l.b16 %v138
    %v182 = vunpack.c.h.b16 %v138
    %v183 = vunpack.c.l.b16 %v139
    %v184 = vunpack.c.h.b16 %v139
    %v185 = vunpack.c.l.b16 %v140
    %v186 = vunpack.c.h.b16 %v140
    %v187 = vunpack.c.l.b16 %v141
    %v188 = vunpack.c.h.b16 %v141
    %v189 = vunpack.c.l.b16 %v142
    %v190 = vunpack.c.h.b16 %v142
    %v191 = vunpack.c.l.b16 %v143
    %v192 = vunpack.c.h.b16 %v143
    %v193 = vunpack.c.l.b16 %v144
    %v194 = vunpack.c.h.b16 %v144
    %v195 = vunpack.c.l.b16 %v145
    %v196 = vunpack.c.h.b16 %v145
    %v197 = vunpack.c.l.b16 %v146
    %v198 = vunpack.c.h.b16 %v146
    %v199 = vunpack.c.l.b16 %v147
    %v200 = vunpack.c.h.b16 %v147
    %v201 = vunpack.c.l.b16 %v148
    %v202 = vunpack.c.h.b16 %v148
    %v203 = vpack.c.b16 %v173, %v171
    %v204 = vpack.c.b16 %v174, %v172
    %v205 = vpack.c.b16 %v177, %v175
    %v206 = vpack.c.b16 %v178, %v176
    %v207 = vpack.c.b16 %v181, %v179
    %v208 = vpack.c.b16 %v182, %v180
    %v209 = vpack.c.b16 %v185, %v183
    %v210 = vpack.c.b16 %v186, %v184
    %v211 = vpack.c.b16 %v189, %v187
    %v212 = vpack.c.b16 %v190, %v188
    %v213 = vpack.c.b16 %v193, %v191
    %v214 = vpack.c.b16 %v194, %v192
    %v215 = vpack.c.b16 %v197, %v195
    %v216 = vpack.c.b16 %v198, %v196
    %v217 = vpack.c.b16 %v201, %v199
    %v218 = vpack.c.b16 %v202, %v200
    %235 = vmatpush.bf16.msra.mxu0 %v217
    %236 = vmatpush.bf16.msra.mxu0 %v215
    %237 = vmatpush.bf16.msra.mxu0 %v213
    %238 = vmatpush.bf16.msra.mxu0 %v211
    %239 = vmatpush.bf16.msra.mxu0 %v209
    %240 = vmatpush.bf16.msra.mxu0 %v207
    %241 = vmatpush.bf16.msra.mxu0 %v205
    %242 = vmatpush.bf16.msra.mxu0 %v203
    %243 = vmatmul.bf16.gmra.mxu0 %v125
    %v244 = vpop.f32.mrf.mxu0
    %v245 = vadd.f32 %v151, %v244
    %v246 = vpop.f32.mrf.mxu0
    %v247 = vadd.f32 %v151, %v246
    %248 = vmatmul.bf16.gmra.mxu0 %v126
    %v249 = vpop.f32.mrf.mxu0
    %v250 = vadd.f32 %v151, %v249
    %v251 = vpop.f32.mrf.mxu0
    %v252 = vadd.f32 %v151, %v251
    %253 = vmatmul.bf16.gmra.mxu0 %v127
    %v254 = vpop.f32.mrf.mxu0
    %v255 = vadd.f32 %v151, %v254
    %v256 = vpop.f32.mrf.mxu0
    %v257 = vadd.f32 %v151, %v256
    %258 = vmatmul.bf16.gmra.mxu0 %v128
    %v259 = vpop.f32.mrf.mxu0
    %v260 = vadd.f32 %v151, %v259
    %v261 = vpop.f32.mrf.mxu0
    %v262 = vadd.f32 %v151, %v261
    %263 = vmatmul.bf16.gmra.mxu0 %v129
    %v264 = vpop.f32.mrf.mxu0
    %v265 = vadd.f32 %v151, %v264
    %v266 = vpop.f32.mrf.mxu0
    %v267 = vadd.f32 %v151, %v266
    %268 = vmatmul.bf16.gmra.mxu0 %v130
    %v269 = vpop.f32.mrf.mxu0
    %v270 = vadd.f32 %v151, %v269
    %v271 = vpop.f32.mrf.mxu0
    %v272 = vadd.f32 %v151, %v271
    %273 = vmatmul.bf16.gmra.mxu0 %v131
    %v274 = vpop.f32.mrf.mxu0
    %v275 = vadd.f32 %v151, %v274
    %v276 = vpop.f32.mrf.mxu0
    %v277 = vadd.f32 %v151, %v276
    %278 = vmatmul.bf16.gmra.mxu0 %v132
    %v279 = vpop.f32.mrf.mxu0
    %v280 = vadd.f32 %v151, %v279
    %v281 = vpop.f32.mrf.mxu0
    %v282 = vadd.f32 %v151, %v281
    %283 = vdwg.mxu0
    %284 = vmatpush.bf16.msra.mxu0 %v218
    %285 = vmatpush.bf16.msra.mxu0 %v216
    %286 = vmatpush.bf16.msra.mxu0 %v214
    %287 = vmatpush.bf16.msra.mxu0 %v212
    %288 = vmatpush.bf16.msra.mxu0 %v210
    %289 = vmatpush.bf16.msra.mxu0 %v208
    %290 = vmatpush.bf16.msra.mxu0 %v206
    %291 = vmatpush.bf16.msra.mxu0 %v204
    %292 = vmatmul.bf16.gmra.mxu0 %v125
    %v293 = vpop.f32.mrf.mxu0
    %v294 = vadd.f32 %v152, %v293
    %v295 = vpop.f32.mrf.mxu0
    %v296 = vadd.f32 %v152, %v295
    %297 = vmatmul.bf16.gmra.mxu0 %v126
    %v298 = vpop.f32.mrf.mxu0
    %v299 = vadd.f32 %v152, %v298
    %v300 = vpop.f32.mrf.mxu0
    %v301 = vadd.f32 %v152, %v300
    %302 = vmatmul.bf16.gmra.mxu0 %v127
    %v303 = vpop.f32.mrf.mxu0
    %v304 = vadd.f32 %v152, %v303
    %v305 = vpop.f32.mrf.mxu0
    %v306 = vadd.f32 %v152, %v305
    %307 = vmatmul.bf16.gmra.mxu0 %v128
    %v308 = vpop.f32.mrf.mxu0
    %v309 = vadd.f32 %v152, %v308
    %v310 = vpop.f32.mrf.mxu0
    %v311 = vadd.f32 %v152, %v310
    %312 = vmatmul.bf16.gmra.mxu0 %v129
    %v313 = vpop.f32.mrf.mxu0
    %v314 = vadd.f32 %v152, %v313
    %v315 = vpop.f32.mrf.mxu0
    %v316 = vadd.f32 %v152, %v315
    %317 = vmatmul.bf16.gmra.mxu0 %v130
    %v318 = vpop.f32.mrf.mxu0
    %v319 = vadd.f32 %v152, %v318
    %v320 = vpop.f32.mrf.mxu0
    %v321 = vadd.f32 %v152, %v320
    %322 = vmatmul.bf16.gmra.mxu0 %v131
    %v323 = vpop.f32.mrf.mxu0
    %v324 = vadd.f32 %v152, %v323
    %v325 = vpop.f32.mrf.mxu0
    %v326 = vadd.f32 %v152, %v325
    %327 = vmatmul.bf16.gmra.mxu0 %v132
    %v328 = vpop.f32.mrf.mxu0
    %v329 = vadd.f32 %v152, %v328
    %v330 = vpop.f32.mrf.mxu0
    %v331 = vadd.f32 %v152, %v330
    %332 = vdwg.mxu0
    %v333 = vmax.f32 %v245, 0.0
    %v334 = vmax.f32 %v294, 0.0
    %v335 = vmax.f32 %v247, 0.0
    %v336 = vmax.f32 %v296, 0.0
    %v337 = vmax.f32 %v250, 0.0
    %v338 = vmax.f32 %v299, 0.0
    %v339 = vmax.f32 %v252, 0.0
    %v340 = vmax.f32 %v301, 0.0
    %v341 = vmax.f32 %v255, 0.0
    %v342 = vmax.f32 %v304, 0.0
    %v343 = vmax.f32 %v257, 0.0
    %v344 = vmax.f32 %v306, 0.0
    %v345 = vmax.f32 %v260, 0.0
    %v346 = vmax.f32 %v309, 0.0
    %v347 = vmax.f32 %v262, 0.0
    %v348 = vmax.f32 %v311, 0.0
    %v349 = vmax.f32 %v265, 0.0
    %v350 = vmax.f32 %v314, 0.0
    %v351 = vmax.f32 %v267, 0.0
    %v352 = vmax.f32 %v316, 0.0
    %v353 = vmax.f32 %v270, 0.0
    %v354 = vmax.f32 %v319, 0.0
    %v355 = vmax.f32 %v272, 0.0
    %v356 = vmax.f32 %v321, 0.0
    %v357 = vmax.f32 %v275, 0.0
    %v358 = vmax.f32 %v324, 0.0
    %v359 = vmax.f32 %v277, 0.0
    %v360 = vmax.f32 %v326, 0.0
    %v361 = vmax.f32 %v280, 0.0
    %v362 = vmax.f32 %v329, 0.0
    %v363 = vmax.f32 %v282, 0.0
    %v364 = vmax.f32 %v331, 0.0
    %v365 = vpack.c.bf16 %v335, %v333
    %v366 = vpack.c.bf16 %v336, %v334
    %v367 = vpack.c.bf16 %v339, %v337
    %v368 = vpack.c.bf16 %v340, %v338
    %v369 = vpack.c.bf16 %v343, %v341
    %v370 = vpack.c.bf16 %v344, %v342
    %v371 = vpack.c.bf16 %v347, %v345
    %v372 = vpack.c.bf16 %v348, %v346
    %v373 = vpack.c.bf16 %v351, %v349
    %v374 = vpack.c.bf16 %v352, %v350
    %v375 = vpack.c.bf16 %v355, %v353
    %v376 = vpack.c.bf16 %v356, %v354
    %v377 = vpack.c.bf16 %v359, %v357
    %v378 = vpack.c.bf16 %v360, %v358
    %v379 = vpack.c.bf16 %v363, %v361
    %v380 = vpack.c.bf16 %v364, %v362
    %v381 = vld [vmem:[#allocation8] sm:$0xff]
    %v382 = vld [vmem:[#allocation8 + $0x8] sm:$0xff]
    %v383 = vld [vmem:[#allocation8 + $0x10] sm:$0xff]
    %v384 = vld [vmem:[#allocation8 + $0x18] sm:$0xff]
    %v385 = vld [vmem:[#allocation8 + $0x20] sm:$0xff]
    %v386 = vld [vmem:[#allocation8 + $0x28] sm:$0xff]
    %v387 = vld [vmem:[#allocation8 + $0x30] sm:$0xff]
    %v388 = vld [vmem:[#allocation8 + $0x38] sm:$0xff]
    %v389 = vld [vmem:[#allocation8 + $0x40] sm:$0xff]
    %v390 = vld [vmem:[#allocation8 + $0x48] sm:$0xff]
    %v391 = vld [vmem:[#allocation8 + $0x50] sm:$0xff]
    %v392 = vld [vmem:[#allocation8 + $0x58] sm:$0xff]
    %v393 = vld [vmem:[#allocation8 + $0x60] sm:$0xff]
    %v394 = vld [vmem:[#allocation8 + $0x68] sm:$0xff]
    %v395 = vld [vmem:[#allocation8 + $0x70] sm:$0xff]
    %v396 = vld [vmem:[#allocation8 + $0x78] sm:$0xff]
    %v397 = vld [vmem:[#allocation8 + $0x80] sm:$0xff]
    %v398 = vld [vmem:[#allocation8 + $0x88] sm:$0xff]
    %v399 = vld [vmem:[#allocation8 + $0x90] sm:$0xff]
    %v400 = vld [vmem:[#allocation8 + $0x98] sm:$0xff]
    %v401 = vld [vmem:[#allocation8 + $0xa0] sm:$0xff]
    %v402 = vld [vmem:[#allocation8 + $0xa8] sm:$0xff]
    %v403 = vld [vmem:[#allocation8 + $0xb0] sm:$0xff]
    %v404 = vld [vmem:[#allocation8 + $0xb8] sm:$0xff]
    %v405 = vld [vmem:[#allocation8 + $0xc0] sm:$0xff]
    %v406 = vld [vmem:[#allocation8 + $0xc8] sm:$0xff]
    %v407 = vld [vmem:[#allocation8 + $0xd0] sm:$0xff]
    %v408 = vld [vmem:[#allocation8 + $0xd8] sm:$0xff]
    %v409 = vld [vmem:[#allocation8 + $0xe0] sm:$0xff]
    %v410 = vld [vmem:[#allocation8 + $0xe8] sm:$0xff]
    %v411 = vld [vmem:[#allocation8 + $0xf0] sm:$0xff]
    %v412 = vld [vmem:[#allocation8 + $0xf8] sm:$0xff]
    %v413 = vld [vmem:[%s4] sm:$0x3]
    %v415 = vperm.slane %v413, 0
    %v416 = vperm.slane %v413, 1
    %v451 = vunpack.c.l.b16 %v381
    %v452 = vunpack.c.h.b16 %v381
    %v453 = vunpack.c.l.b16 %v382
    %v454 = vunpack.c.h.b16 %v382
    %v455 = vunpack.c.l.b16 %v383
    %v456 = vunpack.c.h.b16 %v383
    %v457 = vunpack.c.l.b16 %v384
    %v458 = vunpack.c.h.b16 %v384
    %v459 = vunpack.c.l.b16 %v385
    %v460 = vunpack.c.h.b16 %v385
    %v461 = vunpack.c.l.b16 %v386
    %v462 = vunpack.c.h.b16 %v386
    %v463 = vunpack.c.l.b16 %v387
    %v464 = vunpack.c.h.b16 %v387
    %v465 = vunpack.c.l.b16 %v388
    %v466 = vunpack.c.h.b16 %v388
    %v467 = vunpack.c.l.b16 %v389
    %v468 = vunpack.c.h.b16 %v389
    %v469 = vunpack.c.l.b16 %v390
    %v470 = vunpack.c.h.b16 %v390
    %v471 = vunpack.c.l.b16 %v391
    %v472 = vunpack.c.h.b16 %v391
    %v473 = vunpack.c.l.b16 %v392
    %v474 = vunpack.c.h.b16 %v392
    %v475 = vunpack.c.l.b16 %v393
    %v476 = vunpack.c.h.b16 %v393
    %v477 = vunpack.c.l.b16 %v394
    %v478 = vunpack.c.h.b16 %v394
    %v479 = vunpack.c.l.b16 %v395
    %v480 = vunpack.c.h.b16 %v395
    %v481 = vunpack.c.l.b16 %v396
    %v482 = vunpack.c.h.b16 %v396
    %v483 = vunpack.c.l.b16 %v397
    %v484 = vunpack.c.h.b16 %v397
    %v485 = vunpack.c.l.b16 %v398
    %v486 = vunpack.c.h.b16 %v398
    %v487 = vunpack.c.l.b16 %v399
    %v488 = vunpack.c.h.b16 %v399
    %v489 = vunpack.c.l.b16 %v400
    %v490 = vunpack.c.h.b16 %v400
    %v491 = vunpack.c.l.b16 %v401
    %v492 = vunpack.c.h.b16 %v401
    %v493 = vunpack.c.l.b16 %v402
    %v494 = vunpack.c.h.b16 %v402
    %v495 = vunpack.c.l.b16 %v403
    %v496 = vunpack.c.h.b16 %v403
    %v497 = vunpack.c.l.b16 %v404
    %v498 = vunpack.c.h.b16 %v404
    %v499 = vunpack.c.l.b16 %v405
    %v500 = vunpack.c.h.b16 %v405
    %v501 = vunpack.c.l.b16 %v406
    %v502 = vunpack.c.h.b16 %v406
    %v503 = vunpack.c.l.b16 %v407
    %v504 = vunpack.c.h.b16 %v407
    %v505 = vunpack.c.l.b16 %v408
    %v506 = vunpack.c.h.b16 %v408
    %v507 = vunpack.c.l.b16 %v409
    %v508 = vunpack.c.h.b16 %v409
    %v509 = vunpack.c.l.b16 %v410
    %v510 = vunpack.c.h.b16 %v410
    %v511 = vunpack.c.l.b16 %v411
    %v512 = vunpack.c.h.b16 %v411
    %v513 = vunpack.c.l.b16 %v412
    %v514 = vunpack.c.h.b16 %v412
    %v515 = vpack.c.b16 %v453, %v451
    %v516 = vpack.c.b16 %v454, %v452
    %v517 = vpack.c.b16 %v457, %v455
    %v518 = vpack.c.b16 %v458, %v456
    %v519 = vpack.c.b16 %v461, %v459
    %v520 = vpack.c.b16 %v462, %v460
    %v521 = vpack.c.b16 %v465, %v463
    %v522 = vpack.c.b16 %v466, %v464
    %v523 = vpack.c.b16 %v469, %v467
    %v524 = vpack.c.b16 %v470, %v468
    %v525 = vpack.c.b16 %v473, %v471
    %v526 = vpack.c.b16 %v474, %v472
    %v527 = vpack.c.b16 %v477, %v475
    %v528 = vpack.c.b16 %v478, %v476
    %v529 = vpack.c.b16 %v481, %v479
    %v530 = vpack.c.b16 %v482, %v480
    %v531 = vpack.c.b16 %v485, %v483
    %v532 = vpack.c.b16 %v486, %v484
    %v533 = vpack.c.b16 %v489, %v487
    %v534 = vpack.c.b16 %v490, %v488
    %v535 = vpack.c.b16 %v493, %v491
    %v536 = vpack.c.b16 %v494, %v492
    %v537 = vpack.c.b16 %v497, %v495
    %v538 = vpack.c.b16 %v498, %v496
    %v539 = vpack.c.b16 %v501, %v499
    %v540 = vpack.c.b16 %v502, %v500
    %v541 = vpack.c.b16 %v505, %v503
    %v542 = vpack.c.b16 %v506, %v504
    %v543 = vpack.c.b16 %v509, %v507
    %v544 = vpack.c.b16 %v510, %v508
    %v545 = vpack.c.b16 %v513, %v511
    %v546 = vpack.c.b16 %v514, %v512
    %579 = vmatpush.bf16.msra.mxu0 %v529
    %580 = vmatpush.bf16.msra.mxu0 %v527
    %581 = vmatpush.bf16.msra.mxu0 %v525
    %582 = vmatpush.bf16.msra.mxu0 %v523
    %583 = vmatpush.bf16.msra.mxu0 %v521
    %584 = vmatpush.bf16.msra.mxu0 %v519
    %585 = vmatpush.bf16.msra.mxu0 %v517
    %586 = vmatpush.bf16.msra.mxu0 %v515
    %587 = vmatmul.bf16.gmra.mxu0 %v365
    %v588 = vpop.f32.mrf.mxu0
    %v589 = vadd.f32 %v415, %v588
    %v590 = vpop.f32.mrf.mxu0
    %v591 = vadd.f32 %v415, %v590
    %592 = vmatmul.bf16.gmra.mxu0 %v367
    %v593 = vpop.f32.mrf.mxu0
    %v594 = vadd.f32 %v415, %v593
    %v595 = vpop.f32.mrf.mxu0
    %v596 = vadd.f32 %v415, %v595
    %597 = vmatmul.bf16.gmra.mxu0 %v369
    %v598 = vpop.f32.mrf.mxu0
    %v599 = vadd.f32 %v415, %v598
    %v600 = vpop.f32.mrf.mxu0
    %v601 = vadd.f32 %v415, %v600
    %602 = vmatmul.bf16.gmra.mxu0 %v371
    %v603 = vpop.f32.mrf.mxu0
    %v604 = vadd.f32 %v415, %v603
    %v605 = vpop.f32.mrf.mxu0
    %v606 = vadd.f32 %v415, %v605
    %607 = vmatmul.bf16.gmra.mxu0 %v373
    %v608 = vpop.f32.mrf.mxu0
    %v609 = vadd.f32 %v415, %v608
    %v610 = vpop.f32.mrf.mxu0
    %v611 = vadd.f32 %v415, %v610
    %612 = vmatmul.bf16.gmra.mxu0 %v375
    %v613 = vpop.f32.mrf.mxu0
    %v614 = vadd.f32 %v415, %v613
    %v615 = vpop.f32.mrf.mxu0
    %v616 = vadd.f32 %v415, %v615
    %617 = vmatmul.bf16.gmra.mxu0 %v377
    %v618 = vpop.f32.mrf.mxu0
    %v619 = vadd.f32 %v415, %v618
    %v620 = vpop.f32.mrf.mxu0
    %v621 = vadd.f32 %v415, %v620
    %622 = vmatmul.bf16.gmra.mxu0 %v379
    %v623 = vpop.f32.mrf.mxu0
    %v624 = vadd.f32 %v415, %v623
    %v625 = vpop.f32.mrf.mxu0
    %v626 = vadd.f32 %v415, %v625
    %627 = vdwg.mxu0
    %628 = vmatpush.bf16.msra.mxu0 %v545
    %629 = vmatpush.bf16.msra.mxu0 %v543
    %630 = vmatpush.bf16.msra.mxu0 %v541
    %631 = vmatpush.bf16.msra.mxu0 %v539
    %632 = vmatpush.bf16.msra.mxu0 %v537
    %633 = vmatpush.bf16.msra.mxu0 %v535
    %634 = vmatpush.bf16.msra.mxu0 %v533
    %635 = vmatpush.bf16.msra.mxu0 %v531
    %636 = vmatmul.bf16.gmra.mxu0 %v366
    %v637 = vpop.f32.mrf.mxu0
    %v638 = vadd.f32 %v589, %v637
    %v639 = vpop.f32.mrf.mxu0
    %v640 = vadd.f32 %v591, %v639
    %641 = vmatmul.bf16.gmra.mxu0 %v368
    %v642 = vpop.f32.mrf.mxu0
    %v643 = vadd.f32 %v594, %v642
    %v644 = vpop.f32.mrf.mxu0
    %v645 = vadd.f32 %v596, %v644
    %646 = vmatmul.bf16.gmra.mxu0 %v370
    %v647 = vpop.f32.mrf.mxu0
    %v648 = vadd.f32 %v599, %v647
    %v649 = vpop.f32.mrf.mxu0
    %v650 = vadd.f32 %v601, %v649
    %651 = vmatmul.bf16.gmra.mxu0 %v372
    %v652 = vpop.f32.mrf.mxu0
    %v653 = vadd.f32 %v604, %v652
    %v654 = vpop.f32.mrf.mxu0
    %v655 = vadd.f32 %v606, %v654
    %656 = vmatmul.bf16.gmra.mxu0 %v374
    %v657 = vpop.f32.mrf.mxu0
    %v658 = vadd.f32 %v609, %v657
    %v659 = vpop.f32.mrf.mxu0
    %v660 = vadd.f32 %v611, %v659
    %661 = vmatmul.bf16.gmra.mxu0 %v376
    %v662 = vpop.f32.mrf.mxu0
    %v663 = vadd.f32 %v614, %v662
    %v664 = vpop.f32.mrf.mxu0
    %v665 = vadd.f32 %v616, %v664
    %666 = vmatmul.bf16.gmra.mxu0 %v378
    %v667 = vpop.f32.mrf.mxu0
    %v668 = vadd.f32 %v619, %v667
    %v669 = vpop.f32.mrf.mxu0
    %v670 = vadd.f32 %v621, %v669
    %671 = vmatmul.bf16.gmra.mxu0 %v380
    %v672 = vpop.f32.mrf.mxu0
    %v673 = vadd.f32 %v624, %v672
    %v674 = vpop.f32.mrf.mxu0
    %v675 = vadd.f32 %v626, %v674
    %676 = vdwg.mxu0
    %677 = vmatpush.bf16.msra.mxu0 %v530
    %678 = vmatpush.bf16.msra.mxu0 %v528
    %679 = vmatpush.bf16.msra.mxu0 %v526
    %680 = vmatpush.bf16.msra.mxu0 %v524
    %681 = vmatpush.bf16.msra.mxu0 %v522
    %682 = vmatpush.bf16.msra.mxu0 %v520
    %683 = vmatpush.bf16.msra.mxu0 %v518
    %684 = vmatpush.bf16.msra.mxu0 %v516
    %685 = vmatmul.bf16.gmra.mxu0 %v365
    %v686 = vpop.f32.mrf.mxu0
    %v687 = vadd.f32 %v416, %v686
    %v688 = vpop.f32.mrf.mxu0
    %v689 = vadd.f32 %v416, %v688
    %690 = vmatmul.bf16.gmra.mxu0 %v367
    %v691 = vpop.f32.mrf.mxu0
    %v692 = vadd.f32 %v416, %v691
    %v693 = vpop.f32.mrf.mxu0
    %v694 = vadd.f32 %v416, %v693
    %695 = vmatmul.bf16.gmra.mxu0 %v369
    %v696 = vpop.f32.mrf.mxu0
    %v697 = vadd.f32 %v416, %v696
    %v698 = vpop.f32.mrf.mxu0
    %v699 = vadd.f32 %v416, %v698
    %700 = vmatmul.bf16.gmra.mxu0 %v371
    %v701 = vpop.f32.mrf.mxu0
    %v702 = vadd.f32 %v416, %v701
    %v703 = vpop.f32.mrf.mxu0
    %v704 = vadd.f32 %v416, %v703
    %705 = vmatmul.bf16.gmra.mxu0 %v373
    %v706 = vpop.f32.mrf.mxu0
    %v707 = vadd.f32 %v416, %v706
    %v708 = vpop.f32.mrf.mxu0
    %v709 = vadd.f32 %v416, %v708
    %710 = vmatmul.bf16.gmra.mxu0 %v375
    %v711 = vpop.f32.mrf.mxu0
    %v712 = vadd.f32 %v416, %v711
    %v713 = vpop.f32.mrf.mxu0
    %v714 = vadd.f32 %v416, %v713
    %715 = vmatmul.bf16.gmra.mxu0 %v377
    %v716 = vpop.f32.mrf.mxu0
    %v717 = vadd.f32 %v416, %v716
    %v718 = vpop.f32.mrf.mxu0
    %v719 = vadd.f32 %v416, %v718
    %720 = vmatmul.bf16.gmra.mxu0 %v379
    %v721 = vpop.f32.mrf.mxu0
    %v722 = vadd.f32 %v416, %v721
    %v723 = vpop.f32.mrf.mxu0
    %v724 = vadd.f32 %v416, %v723
    %725 = vdwg.mxu0
    %726 = vmatpush.bf16.msra.mxu0 %v546
    %727 = vmatpush.bf16.msra.mxu0 %v544
    %728 = vmatpush.bf16.msra.mxu0 %v542
    %729 = vmatpush.bf16.msra.mxu0 %v540
    %730 = vmatpush.bf16.msra.mxu0 %v538
    %731 = vmatpush.bf16.msra.mxu0 %v536
    %732 = vmatpush.bf16.msra.mxu0 %v534
    %733 = vmatpush.bf16.msra.mxu0 %v532
    %734 = vmatmul.bf16.gmra.mxu0 %v366
    %v735 = vpop.f32.mrf.mxu0
    %v736 = vadd.f32 %v687, %v735
    %v737 = vpop.f32.mrf.mxu0
    %v738 = vadd.f32 %v689, %v737
    %739 = vmatmul.bf16.gmra.mxu0 %v368
    %v740 = vpop.f32.mrf.mxu0
    %v741 = vadd.f32 %v692, %v740
    %v742 = vpop.f32.mrf.mxu0
    %v743 = vadd.f32 %v694, %v742
    %744 = vmatmul.bf16.gmra.mxu0 %v370
    %v745 = vpop.f32.mrf.mxu0
    %v746 = vadd.f32 %v697, %v745
    %v747 = vpop.f32.mrf.mxu0
    %v748 = vadd.f32 %v699, %v747
    %749 = vmatmul.bf16.gmra.mxu0 %v372
    %v750 = vpop.f32.mrf.mxu0
    %v751 = vadd.f32 %v702, %v750
    %v752 = vpop.f32.mrf.mxu0
    %v753 = vadd.f32 %v704, %v752
    %754 = vmatmul.bf16.gmra.mxu0 %v374
    %v755 = vpop.f32.mrf.mxu0
    %v756 = vadd.f32 %v707, %v755
    %v757 = vpop.f32.mrf.mxu0
    %v758 = vadd.f32 %v709, %v757
    %759 = vmatmul.bf16.gmra.mxu0 %v376
    %v760 = vpop.f32.mrf.mxu0
    %v761 = vadd.f32 %v712, %v760
    %v762 = vpop.f32.mrf.mxu0
    %v763 = vadd.f32 %v714, %v762
    %764 = vmatmul.bf16.gmra.mxu0 %v378
    %v765 = vpop.f32.mrf.mxu0
    %v766 = vadd.f32 %v717, %v765
    %v767 = vpop.f32.mrf.mxu0
    %v768 = vadd.f32 %v719, %v767
    %769 = vmatmul.bf16.gmra.mxu0 %v380
    %v770 = vpop.f32.mrf.mxu0
    %v771 = vadd.f32 %v722, %v770
    %v772 = vpop.f32.mrf.mxu0
    %v773 = vadd.f32 %v724, %v772
    %774 = vdwg.mxu0
    %v775 = vmax.f32 %v638, 0.0
    %v776 = vmax.f32 %v736, 0.0
    %v777 = vmax.f32 %v640, 0.0
    %v778 = vmax.f32 %v738, 0.0
    %v779 = vmax.f32 %v643, 0.0
    %v780 = vmax.f32 %v741, 0.0
    %v781 = vmax.f32 %v645, 0.0
    %v782 = vmax.f32 %v743, 0.0
    %v783 = vmax.f32 %v648, 0.0
    %v784 = vmax.f32 %v746, 0.0
    %v785 = vmax.f32 %v650, 0.0
    %v786 = vmax.f32 %v748, 0.0
    %v787 = vmax.f32 %v653, 0.0
    %v788 = vmax.f32 %v751, 0.0
    %v789 = vmax.f32 %v655, 0.0
    %v790 = vmax.f32 %v753, 0.0
    %v791 = vmax.f32 %v658, 0.0
    %v792 = vmax.f32 %v756, 0.0
    %v793 = vmax.f32 %v660, 0.0
    %v794 = vmax.f32 %v758, 0.0
    %v795 = vmax.f32 %v663, 0.0
    %v796 = vmax.f32 %v761, 0.0
    %v797 = vmax.f32 %v665, 0.0
    %v798 = vmax.f32 %v763, 0.0
    %v799 = vmax.f32 %v668, 0.0
    %v800 = vmax.f32 %v766, 0.0
    %v801 = vmax.f32 %v670, 0.0
    %v802 = vmax.f32 %v768, 0.0
    %v803 = vmax.f32 %v673, 0.0
    %v804 = vmax.f32 %v771, 0.0
    %v805 = vmax.f32 %v675, 0.0
    %v806 = vmax.f32 %v773, 0.0
    %v807 = vpack.c.bf16 %v777, %v775
    %v808 = vpack.c.bf16 %v778, %v776
    %v809 = vpack.c.bf16 %v781, %v779
    %v810 = vpack.c.bf16 %v782, %v780
    %v811 = vpack.c.bf16 %v785, %v783
    %v812 = vpack.c.bf16 %v786, %v784
    %v813 = vpack.c.bf16 %v789, %v787
    %v814 = vpack.c.bf16 %v790, %v788
    %v815 = vpack.c.bf16 %v793, %v791
    %v816 = vpack.c.bf16 %v794, %v792
    %v817 = vpack.c.bf16 %v797, %v795
    %v818 = vpack.c.bf16 %v798, %v796
    %v819 = vpack.c.bf16 %v801, %v799
    %v820 = vpack.c.bf16 %v802, %v800
    %v821 = vpack.c.bf16 %v805, %v803
    %v822 = vpack.c.bf16 %v806, %v804
    %v823 = vld [vmem:[#allocation10] sm:$0xf]
    %v824 = vld [vmem:[#allocation10 + $0x4] sm:$0xf]
    %v825 = vld [vmem:[#allocation10 + $0x8] sm:$0xf]
    %v826 = vld [vmem:[#allocation10 + $0xc] sm:$0xf]
    %v827 = vld [vmem:[#allocation10 + $0x10] sm:$0xf]
    %v828 = vld [vmem:[#allocation10 + $0x14] sm:$0xf]
    %v829 = vld [vmem:[#allocation10 + $0x18] sm:$0xf]
    %v830 = vld [vmem:[#allocation10 + $0x1c] sm:$0xf]
    %v831 = vld [vmem:[#allocation10 + $0x20] sm:$0xf]
    %v832 = vld [vmem:[#allocation10 + $0x24] sm:$0xf]
    %v833 = vld [vmem:[#allocation10 + $0x28] sm:$0xf]
    %v834 = vld [vmem:[#allocation10 + $0x2c] sm:$0xf]
    %v835 = vld [vmem:[#allocation10 + $0x30] sm:$0xf]
    %v836 = vld [vmem:[#allocation10 + $0x34] sm:$0xf]
    %v837 = vld [vmem:[#allocation10 + $0x38] sm:$0xf]
    %v838 = vld [vmem:[#allocation10 + $0x3c] sm:$0xf]
    %v839 = vld [vmem:[#allocation10 + $0x40] sm:$0xf]
    %v840 = vld [vmem:[#allocation10 + $0x44] sm:$0xf]
    %v841 = vld [vmem:[#allocation10 + $0x48] sm:$0xf]
    %v842 = vld [vmem:[#allocation10 + $0x4c] sm:$0xf]
    %v843 = vld [vmem:[#allocation10 + $0x50] sm:$0xf]
    %v844 = vld [vmem:[#allocation10 + $0x54] sm:$0xf]
    %v845 = vld [vmem:[#allocation10 + $0x58] sm:$0xf]
    %v846 = vld [vmem:[#allocation10 + $0x5c] sm:$0xf]
    %v847 = vld [vmem:[#allocation10 + $0x60] sm:$0xf]
    %v848 = vld [vmem:[#allocation10 + $0x64] sm:$0xf]
    %v849 = vld [vmem:[#allocation10 + $0x68] sm:$0xf]
    %v850 = vld [vmem:[#allocation10 + $0x6c] sm:$0xf]
    %v851 = vld [vmem:[#allocation10 + $0x70] sm:$0xf]
    %v852 = vld [vmem:[#allocation10 + $0x74] sm:$0xf]
    %v853 = vld [vmem:[#allocation10 + $0x78] sm:$0xf]
    %v854 = vld [vmem:[#allocation10 + $0x7c] sm:$0xf]
    %v855 = vld [vmem:[%s6] sm:$0x1]
    %v857 = vperm.slane %v855, 0
    %v891 = vunpack.c.l.b16 %v823
    %v892 = vunpack.c.l.b16 %v824
    %v893 = vunpack.c.l.b16 %v825
    %v894 = vunpack.c.l.b16 %v826
    %v895 = vunpack.c.l.b16 %v827
    %v896 = vunpack.c.l.b16 %v828
    %v897 = vunpack.c.l.b16 %v829
    %v898 = vunpack.c.l.b16 %v830
    %v899 = vunpack.c.l.b16 %v831
    %v900 = vunpack.c.l.b16 %v832
    %v901 = vunpack.c.l.b16 %v833
    %v902 = vunpack.c.l.b16 %v834
    %v903 = vunpack.c.l.b16 %v835
    %v904 = vunpack.c.l.b16 %v836
    %v905 = vunpack.c.l.b16 %v837
    %v906 = vunpack.c.l.b16 %v838
    %v907 = vunpack.c.l.b16 %v839
    %v908 = vunpack.c.l.b16 %v840
    %v909 = vunpack.c.l.b16 %v841
    %v910 = vunpack.c.l.b16 %v842
    %v911 = vunpack.c.l.b16 %v843
    %v912 = vunpack.c.l.b16 %v844
    %v913 = vunpack.c.l.b16 %v845
    %v914 = vunpack.c.l.b16 %v846
    %v915 = vunpack.c.l.b16 %v847
    %v916 = vunpack.c.l.b16 %v848
    %v917 = vunpack.c.l.b16 %v849
    %v918 = vunpack.c.l.b16 %v850
    %v919 = vunpack.c.l.b16 %v851
    %v920 = vunpack.c.l.b16 %v852
    %v921 = vunpack.c.l.b16 %v853
    %v922 = vunpack.c.l.b16 %v854
    %v923 = vpack.c.b16 %v892, %v891
    %v924 = vpack.c.b16 %v894, %v893
    %v925 = vpack.c.b16 %v896, %v895
    %v926 = vpack.c.b16 %v898, %v897
    %v927 = vpack.c.b16 %v900, %v899
    %v928 = vpack.c.b16 %v902, %v901
    %v929 = vpack.c.b16 %v904, %v903
    %v930 = vpack.c.b16 %v906, %v905
    %v931 = vpack.c.b16 %v908, %v907
    %v932 = vpack.c.b16 %v910, %v909
    %v933 = vpack.c.b16 %v912, %v911
    %v934 = vpack.c.b16 %v914, %v913
    %v935 = vpack.c.b16 %v916, %v915
    %v936 = vpack.c.b16 %v918, %v917
    %v937 = vpack.c.b16 %v920, %v919
    %v938 = vpack.c.b16 %v922, %v921
    %955 = vmatpush.bf16.msra.mxu0 %v930
    %956 = vmatpush.bf16.msra.mxu0 %v929
    %957 = vmatpush.bf16.msra.mxu0 %v928
    %958 = vmatpush.bf16.msra.mxu0 %v927
    %959 = vmatpush.bf16.msra.mxu0 %v926
    %960 = vmatpush.bf16.msra.mxu0 %v925
    %961 = vmatpush.bf16.msra.mxu0 %v924
    %962 = vmatpush.bf16.msra.mxu0 %v923
    %963 = vmatmul.bf16.gmra.mxu0 %v807
    %v964 = vpop.f32.mrf.mxu0
    %v965 = vadd.f32 %v857, %v964
    %v966 = vpop.f32.mrf.mxu0
    %v967 = vadd.f32 %v857, %v966
    %968 = vmatmul.bf16.gmra.mxu0 %v809
    %v969 = vpop.f32.mrf.mxu0
    %v970 = vadd.f32 %v857, %v969
    %v971 = vpop.f32.mrf.mxu0
    %v972 = vadd.f32 %v857, %v971
    %973 = vmatmul.bf16.gmra.mxu0 %v811
    %v974 = vpop.f32.mrf.mxu0
    %v975 = vadd.f32 %v857, %v974
    %v976 = vpop.f32.mrf.mxu0
    %v977 = vadd.f32 %v857, %v976
    %978 = vmatmul.bf16.gmra.mxu0 %v813
    %v979 = vpop.f32.mrf.mxu0
    %v980 = vadd.f32 %v857, %v979
    %v981 = vpop.f32.mrf.mxu0
    %v982 = vadd.f32 %v857, %v981
    %983 = vmatmul.bf16.gmra.mxu0 %v815
    %v984 = vpop.f32.mrf.mxu0
    %v985 = vadd.f32 %v857, %v984
    %v986 = vpop.f32.mrf.mxu0
    %v987 = vadd.f32 %v857, %v986
    %988 = vmatmul.bf16.gmra.mxu0 %v817
    %v989 = vpop.f32.mrf.mxu0
    %v990 = vadd.f32 %v857, %v989
    %v991 = vpop.f32.mrf.mxu0
    %v992 = vadd.f32 %v857, %v991
    %993 = vmatmul.bf16.gmra.mxu0 %v819
    %v994 = vpop.f32.mrf.mxu0
    %v995 = vadd.f32 %v857, %v994
    %v996 = vpop.f32.mrf.mxu0
    %v997 = vadd.f32 %v857, %v996
    %998 = vmatmul.bf16.gmra.mxu0 %v821
    %v999 = vpop.f32.mrf.mxu0
    %v1000 = vadd.f32 %v857, %v999
    %v1001 = vpop.f32.mrf.mxu0
    %v1002 = vadd.f32 %v857, %v1001
    %1003 = vdwg.mxu0
    %1004 = vmatpush.bf16.msra.mxu0 %v938
    %1005 = vmatpush.bf16.msra.mxu0 %v937
    %1006 = vmatpush.bf16.msra.mxu0 %v936
    %1007 = vmatpush.bf16.msra.mxu0 %v935
    %1008 = vmatpush.bf16.msra.mxu0 %v934
    %1009 = vmatpush.bf16.msra.mxu0 %v933
    %1010 = vmatpush.bf16.msra.mxu0 %v932
    %1011 = vmatpush.bf16.msra.mxu0 %v931
    %1012 = vmatmul.bf16.gmra.mxu0 %v808
    %v1013 = vpop.f32.mrf.mxu0
    %v1014 = vadd.f32 %v965, %v1013
    %v1015 = vpop.f32.mrf.mxu0
    %v1016 = vadd.f32 %v967, %v1015
    %1017 = vmatmul.bf16.gmra.mxu0 %v810
    %v1018 = vpop.f32.mrf.mxu0
    %v1019 = vadd.f32 %v970, %v1018
    %v1020 = vpop.f32.mrf.mxu0
    %v1021 = vadd.f32 %v972, %v1020
    %1022 = vmatmul.bf16.gmra.mxu0 %v812
    %v1023 = vpop.f32.mrf.mxu0
    %v1024 = vadd.f32 %v975, %v1023
    %v1025 = vpop.f32.mrf.mxu0
    %v1026 = vadd.f32 %v977, %v1025
    %1027 = vmatmul.bf16.gmra.mxu0 %v814
    %v1028 = vpop.f32.mrf.mxu0
    %v1029 = vadd.f32 %v980, %v1028
    %v1030 = vpop.f32.mrf.mxu0
    %v1031 = vadd.f32 %v982, %v1030
    %1032 = vmatmul.bf16.gmra.mxu0 %v816
    %v1033 = vpop.f32.mrf.mxu0
    %v1034 = vadd.f32 %v985, %v1033
    %v1035 = vpop.f32.mrf.mxu0
    %v1036 = vadd.f32 %v987, %v1035
    %1037 = vmatmul.bf16.gmra.mxu0 %v818
    %v1038 = vpop.f32.mrf.mxu0
    %v1039 = vadd.f32 %v990, %v1038
    %v1040 = vpop.f32.mrf.mxu0
    %v1041 = vadd.f32 %v992, %v1040
    %1042 = vmatmul.bf16.gmra.mxu0 %v820
    %v1043 = vpop.f32.mrf.mxu0
    %v1044 = vadd.f32 %v995, %v1043
    %v1045 = vpop.f32.mrf.mxu0
    %v1046 = vadd.f32 %v997, %v1045
    %1047 = vmatmul.bf16.gmra.mxu0 %v822
    %v1048 = vpop.f32.mrf.mxu0
    %v1049 = vadd.f32 %v1000, %v1048
    %v1050 = vpop.f32.mrf.mxu0
    %v1051 = vadd.f32 %v1002, %v1050
    %1052 = vdwg.mxu0
    %v1053 = vtanh.pop %v1014
    %v1054 = vtanh.pop %v1016
    %v1055 = vtanh.pop %v1019
    %v1056 = vtanh.pop %v1021
    %v1057 = vtanh.pop %v1024
    %v1058 = vtanh.pop %v1026
    %v1059 = vtanh.pop %v1029
    %v1060 = vtanh.pop %v1031
    %v1061 = vtanh.pop %v1034
    %v1062 = vtanh.pop %v1036
    %v1063 = vtanh.pop %v1039
    %v1064 = vtanh.pop %v1041
    %v1065 = vtanh.pop %v1044
    %v1066 = vtanh.pop %v1046
    %v1067 = vtanh.pop %v1049
    %v1068 = vtanh.pop %v1051
    %v1069 = vld [vmem:[%s7] sm:$0x1]
    %v1071 = vperm.slane %v1069, 0
    %v1073 = vmul.f32 %v1053, %v1071
    %v1074 = vmul.f32 %v1054, %v1071
    %v1075 = vmul.f32 %v1055, %v1071
    %v1076 = vmul.f32 %v1056, %v1071
    %v1077 = vmul.f32 %v1057, %v1071
    %v1078 = vmul.f32 %v1058, %v1071
    %v1079 = vmul.f32 %v1059, %v1071
    %v1080 = vmul.f32 %v1060, %v1071
    %v1081 = vmul.f32 %v1061, %v1071
    %v1082 = vmul.f32 %v1062, %v1071
    %v1083 = vmul.f32 %v1063, %v1071
    %v1084 = vmul.f32 %v1064, %v1071
    %v1085 = vmul.f32 %v1065, %v1071
    %v1086 = vmul.f32 %v1066, %v1071
    %v1087 = vmul.f32 %v1067, %v1071
    %v1088 = vmul.f32 %v1068, %v1071
    %v1089 = vld [vmem:[%s8] sm:$0x1]
    %v1091 = vperm.slane %v1089, 0
    %v1093 = vadd.f32 %v1073, %v1091
    %v1094 = vadd.f32 %v1074, %v1091
    %v1095 = vadd.f32 %v1075, %v1091
    %v1096 = vadd.f32 %v1076, %v1091
    %v1097 = vadd.f32 %v1077, %v1091
    %v1098 = vadd.f32 %v1078, %v1091
    %v1099 = vadd.f32 %v1079, %v1091
    %v1100 = vadd.f32 %v1080, %v1091
    %v1101 = vadd.f32 %v1081, %v1091
    %v1102 = vadd.f32 %v1082, %v1091
    %v1103 = vadd.f32 %v1083, %v1091
    %v1104 = vadd.f32 %v1084, %v1091
    %v1105 = vadd.f32 %v1085, %v1091
    %v1106 = vadd.f32 %v1086, %v1091
    %v1107 = vadd.f32 %v1087, %v1091
    %v1108 = vadd.f32 %v1088, %v1091
    %1109 = vst [vmem:[#allocation11] sm:$0xff] %v1093
    %1110 = vst [vmem:[#allocation11 + $0x8] sm:$0xff] %v1094
    %1111 = vst [vmem:[#allocation11 + $0x10] sm:$0xff] %v1095
    %1112 = vst [vmem:[#allocation11 + $0x18] sm:$0xff] %v1096
    %1113 = vst [vmem:[#allocation11 + $0x20] sm:$0xff] %v1097
    %1114 = vst [vmem:[#allocation11 + $0x28] sm:$0xff] %v1098
    %1115 = vst [vmem:[#allocation11 + $0x30] sm:$0xff] %v1099
    %1116 = vst [vmem:[#allocation11 + $0x38] sm:$0xff] %v1100
    %1117 = vst [vmem:[#allocation11 + $0x40] sm:$0xff] %v1101
    %1118 = vst [vmem:[#allocation11 + $0x48] sm:$0xff] %v1102
    %1119 = vst [vmem:[#allocation11 + $0x50] sm:$0xff] %v1103
    %1120 = vst [vmem:[#allocation11 + $0x58] sm:$0xff] %v1104
    %1121 = vst [vmem:[#allocation11 + $0x60] sm:$0xff] %v1105
    %1122 = vst [vmem:[#allocation11 + $0x68] sm:$0xff] %v1106
    %1123 = vst [vmem:[#allocation11 + $0x70] sm:$0xff] %v1107
    %1124 = vst [vmem:[#allocation11 + $0x78] sm:$0xff] %v1108
    // Predicated region
    $region58: #{tpu_custom_call.1} parent=1 // pred_check
      _
    $region59: #{tpu_custom_call.1} parent=1 // pred_check_branch
      %1126 = sbr.rel (0) target = $region61
    $region60: #{tpu_custom_call.1} parent=1 // pred_region
      %1128 = vsyncadd [#allocation4], 0
      %s1129 = sshll.u32 [#allocation11], 4
      %s1130 = int_to_ptr.vmem [resolvable:$true] %s1129
      %s1131 = sshll.u32 %s9, 4
      %s1132 = int_to_ptr.hbm [resolvable:$true] %s1131
      %1137 = dma.vmem_to_hbm [thread:$0]  %s1130, 2048, %s1132, [#allocation4], 128, 128, 8
    $region61: #{tpu_custom_call.1} parent=1 // pred_fallthru
      _
    // Predicated region
    $region62: #{tpu_custom_call.1} parent=1 // pred_check
      _
    $region63: #{tpu_custom_call.1} parent=1 // pred_check_branch
      %1139 = sbr.rel (0) target = $region65
    $region64: #{tpu_custom_call.1} parent=1 // pred_region
      %1141 = dma.done [#allocation4], 2048
    $region65: #{tpu_custom_call.1} parent=1 // pred_fallthru
      _
    %1142 = vsyncpa [#allocation3], 1
    %1143 = vsyncpa [#allocation6], 1
    %1144 = vsyncpa [#allocation9], 1
    %1145 = vsyncpa [#allocation4], 1

</llo_original>
